<compile_context>
chip_gen: v6e
topology: v6e:2x2x1
jax: 0.10.0
libtpu: 0.0.40
codegen_flags: <defaults>
</compile_context>

<pallas_src>
import math
import numpy as np

import jax
import jax.numpy as jnp
from jax import lax
from jax.experimental import pallas as pl
from jax.experimental.pallas import tpu as pltpu


def _round_up(x: int, m: int) -> int:
    return (x + m - 1) // m * m


def _make_mapping_kernel(n_layers: int, compute_dtype, carry_dtype, unroll):
    """compute_dtype: dtype fed to the MXU (== weights dtype, never upcast in-kernel).
    carry_dtype:   dtype the activation is carried in between layers."""

    def kernel(z_ref, wt_ref, b_ref, o_ref):
        # F.normalize(z, dim=1): x / max(||x||_2, eps), eps = 1e-12 (exact, done once).
        x = z_ref[...].astype(jnp.float32)
        norm = jnp.sqrt(jnp.sum(x * x, axis=1, keepdims=True))
        h0 = (x / jnp.maximum(norm, 1e-12)).astype(carry_dtype)

        def layer(l, h):
            w = wt_ref[l]                      # (Fp, Fp) in weights_dtype: no in-kernel upcast
            b = b_ref[l]                       # (1, Fp), f32
            y = jnp.dot(h.astype(compute_dtype), w,
                        preferred_element_type=jnp.float32) + b
            y = jnp.maximum(y, 0.2 * y)        # LeakyReLU(0.2), exact in f32
            return y.astype(carry_dtype)

        h = lax.fori_loop(0, n_layers, layer, h0, unroll=unroll)
        o_ref[...] = h.astype(o_ref.dtype)

    return kernel


def mapping_network_c2s(z, weights, biases, *, block_b: int = 256,
                        weights_dtype=jnp.float32, carry_dtype=None):
    """z: (B, F); weights: (L, F_out, F_in) per layer; biases: (L, F_out).

    weights_dtype=jnp.bfloat16 feeds both MXU operands at native bf16 rate on v6e/v7x
    (f32 accumulation) and halves weight DMA bytes; the default f32 path matches the
    PyTorch f32 forward to tight tolerance.  carry_dtype overrides the inter-layer
    activation dtype (None = auto: weights_dtype on v6e/v7x, f32 on v5e / f32 weights).
    """
    B, F = z.shape
    L, F_out, F_in = weights.shape
    assert F_out == F and F_in == F

    w_dt = np.dtype(weights_dtype)
    if carry_dtype is None:
        if w_dt.itemsize >= 4:
            carry_dtype = jnp.float32
        else:
            try:
                kind = jax.devices()[0].device_kind.lower()
            except Exception:
                kind = ""
            # v5e has no bf16 VPU: keep the LeakyReLU / carry in f32 there.
            carry_dtype = jnp.float32 if ("v5 lite" in kind or "v5e" in kind) else weights_dtype

    # Equalized-lr scale folded into the wrapper-side transpose (fused by XLA, free).
    c = 1.0 / math.sqrt(F_in)
    wt = jnp.transpose(weights, (0, 2, 1)) * c           # (L, F_in, F_out), f32
    b3 = biases.reshape(L, 1, F).astype(jnp.float32)     # (L, 1, F)

    # Lane-pad the feature dim to a multiple of 128.  Zero weight rows/cols, zero bias
    # pad and LeakyReLU(0)=0 keep the first F output columns bit-identical, and the pad
    # columns of z are zero so the L2 norm is unchanged.  Sliced off below.
    Fp = max(128, _round_up(F, 128))
    if Fp != F:
        wt = jnp.pad(wt, ((0, 0), (0, Fp - F), (0, Fp - F)))
        b3 = jnp.pad(b3, ((0, 0), (0, 0), (0, Fp - F)))
        z_in = jnp.pad(z, ((0, 0), (0, Fp - F)))
    else:
        z_in = z
    wt = wt.astype(weights_dtype)

    # Batch tiling: multiple of 8 sublanes, up to block_b rows per tile.  Pad rows are
    # all-zero (norm clamps to eps) and sliced off afterwards.
    bm = min(block_b, _round_up(B, 8))
    pad_b = (-B) % bm
    if pad_b:
        z_in = jnp.pad(z_in, ((0, pad_b), (0, 0)))
    Bp = B + pad_b
    n_tiles = Bp // bm

    # Short layer chains get unrolled (LLO scheduler visibility); long chains at large F
    # stay rolled so live ranges / code size remain bounded.
    unroll = L <= 4

    kernel = _make_mapping_kernel(L, weights_dtype, carry_dtype, unroll)

    # Explicit VMEM budget (v5e default scoped limit is only 16 MiB; v7x has 64 MiB/TC).
    act_bytes = np.dtype(z.dtype).itemsize
    vmem_need = (
        2 * bm * Fp * act_bytes            # input tiles (double-buffered)
        + 2 * bm * Fp * act_bytes          # output tiles (double-buffered)
        + 2 * L * Fp * Fp * w_dt.itemsize  # weight stack (worst case: double-buffered)
        + 2 * L * 8 * Fp * 4               # bias stack (sublane-padded)
    )
    vmem_limit = int(min(max(vmem_need * 3 // 2 + (2 << 20), 16 << 20), 64 << 20))

    cost = pl.CostEstimate(
        flops=int(2 * Bp * Fp * Fp * L + 6 * Bp * Fp),
        transcendentals=int(Bp),
        bytes_accessed=int(2 * Bp * Fp * act_bytes
                           + L * Fp * Fp * w_dt.itemsize
                           + L * Fp * 4),
    )

    def _run(single_buffer_weights: bool):
        # Grid-invariant weight/bias blocks: single buffering halves their VMEM footprint.
        resident = dict(pipeline_mode=pl.Buffered(1)) if single_buffer_weights else {}
        grid_spec = pltpu.PrefetchScalarGridSpec(
            num_scalar_prefetch=0,
            grid=(n_tiles,),
            in_specs=[
                pl.BlockSpec((bm, Fp), lambda i: (i, 0)),                    # activations
                pl.BlockSpec((L, Fp, Fp), lambda i: (0, 0, 0), **resident),  # weight stack
                pl.BlockSpec((L, 1, Fp), lambda i: (0, 0, 0), **resident),   # bias stack
            ],
            out_specs=pl.BlockSpec((bm, Fp), lambda i: (i, 0)),
        )
        return pl.pallas_call(
            kernel,
            out_shape=jax.ShapeDtypeStruct((Bp, Fp), z.dtype),
            grid_spec=grid_spec,
            compiler_params=pltpu.CompilerParams(
                dimension_semantics=("parallel",),   # batch tiles are independent (megacore)
                vmem_limit_bytes=vmem_limit,
            ),
            cost_estimate=cost,
        )(z_in, wt, b3)

    try:
        out = _run(True)
    except Exception:
        # pipeline_mode=pl.Buffered(1) not supported on this jax build -> default buffering.
        out = _run(False)

    if pad_b or Fp != F:
        out = out[:B, :F]
    return out


def mapping_network_ref(z, weights, biases):
    """Pure-JAX reference mirroring the PyTorch forward."""
    F = z.shape[1]
    c = 1.0 / math.sqrt(F)
    norm = jnp.sqrt(jnp.sum(z * z, axis=1, keepdims=True))
    h = z / jnp.maximum(norm, 1e-12)
    for l in range(weights.shape[0]):
        y = h @ (weights[l] * c).T + biases[l]
        h = jnp.where(y >= 0.0, y, 0.2 * y)
    return h


if __name__ == "__main__":
    batch = 8
    features = 32
    n_layers = 4

    key = jax.random.PRNGKey(0)
    kz, kw = jax.random.split(key)

    z = jax.random.normal(kz, (batch, features), dtype=jnp.float32)
    # EqualizedWeight: weight ~ N(0,1), shape (out_features, in_features) per layer.
    weights = jax.random.normal(kw, (n_layers, features, features), dtype=jnp.float32)
    # EqualizedLinear bias init = 0.0
    biases = jnp.zeros((n_layers, features), dtype=jnp.float32)

    out = mapping_network_c2s(z, weights, biases)
    out = jax.block_until_ready(out)

    ref = mapping_network_ref(z, weights, biases)
    assert out.shape == (batch, features)
    assert jnp.allclose(out, ref, atol=1e-4, rtol=1e-4), "mismatch vs reference"

    print("KERNEL_OK")
</pallas_src>

<mosaic_0001>
module attributes {stable_mosaic.version = 11 : i64} {
  func.func @kernel(%arg0: i32, %arg1: memref<8x128xf32, #tpu.memory_space<vmem>>, %arg2: memref<4x128x128xf32, #tpu.memory_space<vmem>>, %arg3: memref<4x1x128xf32, #tpu.memory_space<vmem>>, %arg4: memref<8x128xf32, #tpu.memory_space<vmem>>) attributes {dimension_semantics = [#tpu.dimension_semantics<parallel>], iteration_bounds = array<i64: 1>, scalar_prefetch = 0 : i64, scratch_operands = 0 : i64, tpu.core_type = #tpu.core_type<tc>, window_params = [{transform_indices = @transform_0, window_bounds = array<i64: 8, 128>}, {pipeline_mode = #tpu.pipeline_mode<synchronous>, transform_indices = @transform_1, window_bounds = array<i64: 4, 128, 128>}, {pipeline_mode = #tpu.pipeline_mode<synchronous>, transform_indices = @transform_2, window_bounds = array<i64: 4, 1, 128>}, {transform_indices = @transform_3, window_bounds = array<i64: 8, 128>}]} {
    %c0 = arith.constant 0 : index
    %c0_0 = arith.constant 0 : index
    %0 = vector.load %arg1[%c0, %c0_0] : memref<8x128xf32, #tpu.memory_space<vmem>>, vector<8x128xf32>
    %1 = arith.mulf %0, %0 : vector<8x128xf32>
    %cst = arith.constant dense<0.000000e+00> : vector<8xf32>
    %2 = vector.multi_reduction <add>, %1, %cst [1] : vector<8x128xf32> to vector<8xf32>
    %3 = vector.shape_cast %2 : vector<8xf32> to vector<8x1xf32>
    %4 = math.sqrt %3 : vector<8x1xf32>
    %cst_1 = arith.constant 9.99999996E-13 : f32
    %5 = vector.broadcast %cst_1 : f32 to vector<8x1xf32>
    %6 = arith.maximumf %4, %5 : vector<8x1xf32>
    %7 = vector.broadcast %6 : vector<8x1xf32> to vector<8x128xf32>
    %8 = arith.divf %0, %7 : vector<8x128xf32>
    %c0_i32 = arith.constant 0 : i32
    %9 = arith.index_cast %c0_i32 : i32 to index
    %c0_2 = arith.constant 0 : index
    %c0_3 = arith.constant 0 : index
    %10 = vector.load %arg2[%9, %c0_2, %c0_3] : memref<4x128x128xf32, #tpu.memory_space<vmem>>, vector<1x128x128xf32>
    %11 = vector.shape_cast %10 : vector<1x128x128xf32> to vector<128x128xf32>
    %12 = arith.index_cast %c0_i32 : i32 to index
    %c0_4 = arith.constant 0 : index
    %c0_5 = arith.constant 0 : index
    %13 = vector.load %arg3[%12, %c0_4, %c0_5] : memref<4x1x128xf32, #tpu.memory_space<vmem>>, vector<1x1x128xf32>
    %14 = vector.shape_cast %13 : vector<1x1x128xf32> to vector<1x128xf32>
    %cst_6 = arith.constant dense<0.000000e+00> : vector<8x128xf32>
    %15 = tpu.matmul %8, %11, %cst_6 {dimension_numbers = #tpu.dot_dimension_numbers<[1], [0], [0], [1], [0, 0, 1, 1], [], []>} : vector<8x128xf32>, vector<128x128xf32>, vector<8x128xf32> -> vector<8x128xf32>
    %16 = vector.broadcast %14 : vector<1x128xf32> to vector<8x128xf32>
    %17 = arith.addf %15, %16 : vector<8x128xf32>
    %cst_7 = arith.constant 2.000000e-01 : f32
    %18 = vector.broadcast %cst_7 : f32 to vector<8x128xf32>
    %19 = arith.mulf %18, %17 : vector<8x128xf32>
    %20 = arith.maximumf %17, %19 : vector<8x128xf32>
    %c1_i32 = arith.constant 1 : i32
    %21 = arith.index_cast %c1_i32 : i32 to index
    %c0_8 = arith.constant 0 : index
    %c0_9 = arith.constant 0 : index
    %22 = vector.load %arg2[%21, %c0_8, %c0_9] : memref<4x128x128xf32, #tpu.memory_space<vmem>>, vector<1x128x128xf32>
    %23 = vector.shape_cast %22 : vector<1x128x128xf32> to vector<128x128xf32>
    %24 = arith.index_cast %c1_i32 : i32 to index
    %c0_10 = arith.constant 0 : index
    %c0_11 = arith.constant 0 : index
    %25 = vector.load %arg3[%24, %c0_10, %c0_11] : memref<4x1x128xf32, #tpu.memory_space<vmem>>, vector<1x1x128xf32>
    %26 = vector.shape_cast %25 : vector<1x1x128xf32> to vector<1x128xf32>
    %cst_12 = arith.constant dense<0.000000e+00> : vector<8x128xf32>
    %27 = tpu.matmul %20, %23, %cst_12 {dimension_numbers = #tpu.dot_dimension_numbers<[1], [0], [0], [1], [0, 0, 1, 1], [], []>} : vector<8x128xf32>, vector<128x128xf32>, vector<8x128xf32> -> vector<8x128xf32>
    %28 = vector.broadcast %26 : vector<1x128xf32> to vector<8x128xf32>
    %29 = arith.addf %27, %28 : vector<8x128xf32>
    %cst_13 = arith.constant 2.000000e-01 : f32
    %30 = vector.broadcast %cst_13 : f32 to vector<8x128xf32>
    %31 = arith.mulf %30, %29 : vector<8x128xf32>
    %32 = arith.maximumf %29, %31 : vector<8x128xf32>
    %c2_i32 = arith.constant 2 : i32
    %33 = arith.index_cast %c2_i32 : i32 to index
    %c0_14 = arith.constant 0 : index
    %c0_15 = arith.constant 0 : index
    %34 = vector.load %arg2[%33, %c0_14, %c0_15] : memref<4x128x128xf32, #tpu.memory_space<vmem>>, vector<1x128x128xf32>
    %35 = vector.shape_cast %34 : vector<1x128x128xf32> to vector<128x128xf32>
    %36 = arith.index_cast %c2_i32 : i32 to index
    %c0_16 = arith.constant 0 : index
    %c0_17 = arith.constant 0 : index
    %37 = vector.load %arg3[%36, %c0_16, %c0_17] : memref<4x1x128xf32, #tpu.memory_space<vmem>>, vector<1x1x128xf32>
    %38 = vector.shape_cast %37 : vector<1x1x128xf32> to vector<1x128xf32>
    %cst_18 = arith.constant dense<0.000000e+00> : vector<8x128xf32>
    %39 = tpu.matmul %32, %35, %cst_18 {dimension_numbers = #tpu.dot_dimension_numbers<[1], [0], [0], [1], [0, 0, 1, 1], [], []>} : vector<8x128xf32>, vector<128x128xf32>, vector<8x128xf32> -> vector<8x128xf32>
    %40 = vector.broadcast %38 : vector<1x128xf32> to vector<8x128xf32>
    %41 = arith.addf %39, %40 : vector<8x128xf32>
    %cst_19 = arith.constant 2.000000e-01 : f32
    %42 = vector.broadcast %cst_19 : f32 to vector<8x128xf32>
    %43 = arith.mulf %42, %41 : vector<8x128xf32>
    %44 = arith.maximumf %41, %43 : vector<8x128xf32>
    %c3_i32 = arith.constant 3 : i32
    %45 = arith.index_cast %c3_i32 : i32 to index
    %c0_20 = arith.constant 0 : index
    %c0_21 = arith.constant 0 : index
    %46 = vector.load %arg2[%45, %c0_20, %c0_21] : memref<4x128x128xf32, #tpu.memory_space<vmem>>, vector<1x128x128xf32>
    %47 = vector.shape_cast %46 : vector<1x128x128xf32> to vector<128x128xf32>
    %48 = arith.index_cast %c3_i32 : i32 to index
    %c0_22 = arith.constant 0 : index
    %c0_23 = arith.constant 0 : index
    %49 = vector.load %arg3[%48, %c0_22, %c0_23] : memref<4x1x128xf32, #tpu.memory_space<vmem>>, vector<1x1x128xf32>
    %50 = vector.shape_cast %49 : vector<1x1x128xf32> to vector<1x128xf32>
    %cst_24 = arith.constant dense<0.000000e+00> : vector<8x128xf32>
    %51 = tpu.matmul %44, %47, %cst_24 {dimension_numbers = #tpu.dot_dimension_numbers<[1], [0], [0], [1], [0, 0, 1, 1], [], []>} : vector<8x128xf32>, vector<128x128xf32>, vector<8x128xf32> -> vector<8x128xf32>
    %52 = vector.broadcast %50 : vector<1x128xf32> to vector<8x128xf32>
    %53 = arith.addf %51, %52 : vector<8x128xf32>
    %cst_25 = arith.constant 2.000000e-01 : f32
    %54 = vector.broadcast %cst_25 : f32 to vector<8x128xf32>
    %55 = arith.mulf %54, %53 : vector<8x128xf32>
    %56 = arith.maximumf %53, %55 : vector<8x128xf32>
    %c4_i32 = arith.constant 4 : i32
    %c0_26 = arith.constant 0 : index
    %c0_27 = arith.constant 0 : index
    %57 = vector.load %arg4[%c0_26, %c0_27] : memref<8x128xf32, #tpu.memory_space<vmem>>, vector<8x128xf32>
    tpu.vector_store %arg4[%c0_26, %c0_27], %56 {strides = array<i32>} : memref<8x128xf32, #tpu.memory_space<vmem>>, vector<8x128xf32>,
    return
  }
  func.func @transform_0(%arg0: i32) -> (i32, i32) {
    %c0_i32 = arith.constant 0 : i32
    %c0_i32_0 = arith.constant 0 : i32
    return %arg0, %c0_i32 : i32, i32
  }
  func.func @transform_1(%arg0: i32) -> (i32, i32, i32) {
    %c0_i32 = arith.constant 0 : i32
    %c0_i32_0 = arith.constant 0 : i32
    %c0_i32_1 = arith.constant 0 : i32
    %c0_i32_2 = arith.constant 0 : i32
    return %c0_i32, %c0_i32_0, %c0_i32_1 : i32, i32, i32
  }
  func.func @transform_2(%arg0: i32) -> (i32, i32, i32) {
    %c0_i32 = arith.constant 0 : i32
    %c0_i32_0 = arith.constant 0 : i32
    %c0_i32_1 = arith.constant 0 : i32
    %c0_i32_2 = arith.constant 0 : i32
    return %c0_i32, %c0_i32_0, %c0_i32_1 : i32, i32, i32
  }
  func.func @transform_3(%arg0: i32) -> (i32, i32) {
    %c0_i32 = arith.constant 0 : i32
    %c0_i32_0 = arith.constant 0 : i32
    return %arg0, %c0_i32 : i32, i32
  }
}

module attributes {stable_mosaic.version = 11 : i64} {
  func.func @kernel(%arg0: i32, %arg1: memref<8x128xf32, #tpu.memory_space<vmem>>, %arg2: memref<4x128x128xf32, #tpu.memory_space<vmem>>, %arg3: memref<4x1x128xf32, #tpu.memory_space<vmem>>, %arg4: memref<8x128xf32, #tpu.memory_space<vmem>>) attributes {dimension_semantics = [#tpu.dimension_semantics<parallel>], iteration_bounds = array<i64: 1>, scalar_prefetch = 0 : i64, scratch_operands = 0 : i64, tpu.core_type = #tpu.core_type<tc>, window_params = [{transform_indices = @transform_0, window_bounds = array<i64: 8, 128>}, {pipeline_mode = #tpu.pipeline_mode<synchronous>, transform_indices = @transform_1, window_bounds = array<i64: 4, 128, 128>}, {pipeline_mode = #tpu.pipeline_mode<synchronous>, transform_indices = @transform_2, window_bounds = array<i64: 4, 1, 128>}, {transform_indices = @transform_3, window_bounds = array<i64: 8, 128>}]} {
    %c0 = arith.constant 0 : index
    %c0_0 = arith.constant 0 : index
    %0 = vector.load %arg1[%c0, %c0_0] : memref<8x128xf32, #tpu.memory_space<vmem>>, vector<8x128xf32>
    %1 = arith.mulf %0, %0 : vector<8x128xf32>
    %cst = arith.constant dense<0.000000e+00> : vector<8xf32>
    %2 = vector.multi_reduction <add>, %1, %cst [1] : vector<8x128xf32> to vector<8xf32>
    %3 = vector.shape_cast %2 : vector<8xf32> to vector<8x1xf32>
    %4 = math.sqrt %3 : vector<8x1xf32>
    %cst_1 = arith.constant 9.99999996E-13 : f32
    %5 = vector.broadcast %cst_1 : f32 to vector<8x1xf32>
    %6 = arith.maximumf %4, %5 : vector<8x1xf32>
    %7 = vector.broadcast %6 : vector<8x1xf32> to vector<8x128xf32>
    %8 = arith.divf %0, %7 : vector<8x128xf32>
    %c0_i32 = arith.constant 0 : i32
    %9 = arith.index_cast %c0_i32 : i32 to index
    %c0_2 = arith.constant 0 : index
    %c0_3 = arith.constant 0 : index
    %10 = vector.load %arg2[%9, %c0_2, %c0_3] : memref<4x128x128xf32, #tpu.memory_space<vmem>>, vector<1x128x128xf32>
    %11 = vector.shape_cast %10 : vector<1x128x128xf32> to vector<128x128xf32>
    %12 = arith.index_cast %c0_i32 : i32 to index
    %c0_4 = arith.constant 0 : index
    %c0_5 = arith.constant 0 : index
    %13 = vector.load %arg3[%12, %c0_4, %c0_5] : memref<4x1x128xf32, #tpu.memory_space<vmem>>, vector<1x1x128xf32>
    %14 = vector.shape_cast %13 : vector<1x1x128xf32> to vector<1x128xf32>
    %cst_6 = arith.constant dense<0.000000e+00> : vector<8x128xf32>
    %15 = tpu.matmul %8, %11, %cst_6 {dimension_numbers = #tpu.dot_dimension_numbers<[1], [0], [0], [1], [0, 0, 1, 1], [], []>} : vector<8x128xf32>, vector<128x128xf32>, vector<8x128xf32> -> vector<8x128xf32>
    %16 = vector.broadcast %14 : vector<1x128xf32> to vector<8x128xf32>
    %17 = arith.addf %15, %16 : vector<8x128xf32>
    %cst_7 = arith.constant 2.000000e-01 : f32
    %18 = vector.broadcast %cst_7 : f32 to vector<8x128xf32>
    %19 = arith.mulf %18, %17 : vector<8x128xf32>
    %20 = arith.maximumf %17, %19 : vector<8x128xf32>
    %c1_i32 = arith.constant 1 : i32
    %21 = arith.index_cast %c1_i32 : i32 to index
    %c0_8 = arith.constant 0 : index
    %c0_9 = arith.constant 0 : index
    %22 = vector.load %arg2[%21, %c0_8, %c0_9] : memref<4x128x128xf32, #tpu.memory_space<vmem>>, vector<1x128x128xf32>
    %23 = vector.shape_cast %22 : vector<1x128x128xf32> to vector<128x128xf32>
    %24 = arith.index_cast %c1_i32 : i32 to index
    %c0_10 = arith.constant 0 : index
    %c0_11 = arith.constant 0 : index
    %25 = vector.load %arg3[%24, %c0_10, %c0_11] : memref<4x1x128xf32, #tpu.memory_space<vmem>>, vector<1x1x128xf32>
    %26 = vector.shape_cast %25 : vector<1x1x128xf32> to vector<1x128xf32>
    %cst_12 = arith.constant dense<0.000000e+00> : vector<8x128xf32>
    %27 = tpu.matmul %20, %23, %cst_12 {dimension_numbers = #tpu.dot_dimension_numbers<[1], [0], [0], [1], [0, 0, 1, 1], [], []>} : vector<8x128xf32>, vector<128x128xf32>, vector<8x128xf32> -> vector<8x128xf32>
    %28 = vector.broadcast %26 : vector<1x128xf32> to vector<8x128xf32>
    %29 = arith.addf %27, %28 : vector<8x128xf32>
    %cst_13 = arith.constant 2.000000e-01 : f32
    %30 = vector.broadcast %cst_13 : f32 to vector<8x128xf32>
    %31 = arith.mulf %30, %29 : vector<8x128xf32>
    %32 = arith.maximumf %29, %31 : vector<8x128xf32>
    %c2_i32 = arith.constant 2 : i32
    %33 = arith.index_cast %c2_i32 : i32 to index
    %c0_14 = arith.constant 0 : index
    %c0_15 = arith.constant 0 : index
    %34 = vector.load %arg2[%33, %c0_14, %c0_15] : memref<4x128x128xf32, #tpu.memory_space<vmem>>, vector<1x128x128xf32>
    %35 = vector.shape_cast %34 : vector<1x128x128xf32> to vector<128x128xf32>
    %36 = arith.index_cast %c2_i32 : i32 to index
    %c0_16 = arith.constant 0 : index
    %c0_17 = arith.constant 0 : index
    %37 = vector.load %arg3[%36, %c0_16, %c0_17] : memref<4x1x128xf32, #tpu.memory_space<vmem>>, vector<1x1x128xf32>
    %38 = vector.shape_cast %37 : vector<1x1x128xf32> to vector<1x128xf32>
    %cst_18 = arith.constant dense<0.000000e+00> : vector<8x128xf32>
    %39 = tpu.matmul %32, %35, %cst_18 {dimension_numbers = #tpu.dot_dimension_numbers<[1], [0], [0], [1], [0, 0, 1, 1], [], []>} : vector<8x128xf32>, vector<128x128xf32>, vector<8x128xf32> -> vector<8x128xf32>
    %40 = vector.broadcast %38 : vector<1x128xf32> to vector<8x128xf32>
    %41 = arith.addf %39, %40 : vector<8x128xf32>
    %cst_19 = arith.constant 2.000000e-01 : f32
    %42 = vector.broadcast %cst_19 : f32 to vector<8x128xf32>
    %43 = arith.mulf %42, %41 : vector<8x128xf32>
    %44 = arith.maximumf %41, %43 : vector<8x128xf32>
    %c3_i32 = arith.constant 3 : i32
    %45 = arith.index_cast %c3_i32 : i32 to index
    %c0_20 = arith.constant 0 : index
    %c0_21 = arith.constant 0 : index
    %46 = vector.load %arg2[%45, %c0_20, %c0_21] : memref<4x128x128xf32, #tpu.memory_space<vmem>>, vector<1x128x128xf32>
    %47 = vector.shape_cast %46 : vector<1x128x128xf32> to vector<128x128xf32>
    %48 = arith.index_cast %c3_i32 : i32 to index
    %c0_22 = arith.constant 0 : index
    %c0_23 = arith.constant 0 : index
    %49 = vector.load %arg3[%48, %c0_22, %c0_23] : memref<4x1x128xf32, #tpu.memory_space<vmem>>, vector<1x1x128xf32>
    %50 = vector.shape_cast %49 : vector<1x1x128xf32> to vector<1x128xf32>
    %cst_24 = arith.constant dense<0.000000e+00> : vector<8x128xf32>
    %51 = tpu.matmul %44, %47, %cst_24 {dimension_numbers = #tpu.dot_dimension_numbers<[1], [0], [0], [1], [0, 0, 1, 1], [], []>} : vector<8x128xf32>, vector<128x128xf32>, vector<8x128xf32> -> vector<8x128xf32>
    %52 = vector.broadcast %50 : vector<1x128xf32> to vector<8x128xf32>
    %53 = arith.addf %51, %52 : vector<8x128xf32>
    %cst_25 = arith.constant 2.000000e-01 : f32
    %54 = vector.broadcast %cst_25 : f32 to vector<8x128xf32>
    %55 = arith.mulf %54, %53 : vector<8x128xf32>
    %56 = arith.maximumf %53, %55 : vector<8x128xf32>
    %c4_i32 = arith.constant 4 : i32
    %c0_26 = arith.constant 0 : index
    %c0_27 = arith.constant 0 : index
    %57 = vector.load %arg4[%c0_26, %c0_27] : memref<8x128xf32, #tpu.memory_space<vmem>>, vector<8x128xf32>
    tpu.vector_store %arg4[%c0_26, %c0_27], %56 {strides = array<i32>} : memref<8x128xf32, #tpu.memory_space<vmem>>, vector<8x128xf32>,
    return
  }
  func.func @transform_0(%arg0: i32) -> (i32, i32) {
    %c0_i32 = arith.constant 0 : i32
    %c0_i32_0 = arith.constant 0 : i32
    return %arg0, %c0_i32 : i32, i32
  }
  func.func @transform_1(%arg0: i32) -> (i32, i32, i32) {
    %c0_i32 = arith.constant 0 : i32
    %c0_i32_0 = arith.constant 0 : i32
    %c0_i32_1 = arith.constant 0 : i32
    %c0_i32_2 = arith.constant 0 : i32
    return %c0_i32, %c0_i32_0, %c0_i32_1 : i32, i32, i32
  }
  func.func @transform_2(%arg0: i32) -> (i32, i32, i32) {
    %c0_i32 = arith.constant 0 : i32
    %c0_i32_0 = arith.constant 0 : i32
    %c0_i32_1 = arith.constant 0 : i32
    %c0_i32_2 = arith.constant 0 : i32
    return %c0_i32, %c0_i32_0, %c0_i32_1 : i32, i32, i32
  }
  func.func @transform_3(%arg0: i32) -> (i32, i32) {
    %c0_i32 = arith.constant 0 : i32
    %c0_i32_0 = arith.constant 0 : i32
    return %arg0, %c0_i32 : i32, i32
  }
}

</mosaic_0001>

<llo_original>
// kernel: tpu_custom_call.1
$region0: #{tpu_custom_call.1}
  #allocation0 [shape = 'u32[]', space=smem, size = 0x4, offset = 0x4, fixed_abs, tag = 'smem constant byte address 0x4 - core index']
  #allocation1 [shape = 'u32[144,128]{1,0:T(1,128)}', space=vmem, size = 0x12000, scoped, tag = 'internal scratch']
  %s0 = inlined_call_operand.hbm [shape: f32[8,128], index: 0, kind: input, shape index: {}]
  %s1 = inlined_call_operand.hbm [shape: f32[4,128,128], index: 1, kind: input, shape index: {}]
  %s2 = inlined_call_operand.hbm [shape: f32[4,1,128], index: 2, kind: input, shape index: {}]
  %s3 = inlined_call_operand.hbm [shape: f32[8,128], index: 3, kind: output, shape index: {}]
  %s4 = sld [smem:[#allocation0]]
  $region34: #{tpu_custom_call.1} parent=0
    _
  %s6 = ssub.s32 1, %s4
  %s7 = scalar_select 0, %s6, %s4
  $region1: #{tpu_custom_call.1} parent=0
    #allocation2 [shape = 'u8[4096]{0}', space=vmem, size = 0x1000, scoped, tag = 'input window, operand 0, single buffered']
    #allocation3 [shape = 's32[1]{0}', space=sflag, size = 0x4, scoped, tag = 'scoped memory for tpu_custom_call.1']
    #allocation4 [shape = 's32[1]{0}', space=sflag, size = 0x4, scoped, tag = 'scoped memory for tpu_custom_call.1']
    #allocation5 [shape = 'u8[262144]{0}', space=vmem, size = 0x40000, scoped, tag = 'input window, operand 1, single buffered']
    #allocation6 [shape = 's32[1]{0}', space=sflag, size = 0x4, scoped, tag = 'scoped memory for tpu_custom_call.1']
    #allocation7 [shape = 'u8[2048]{0}', space=vmem, size = 0x800, scoped, tag = 'input window, operand 2, single buffered']
    #allocation8 [shape = 'u8[4096]{0}', space=vmem, size = 0x1000, scoped, tag = 'output window, operand 0, single buffered']
    %8 = vsyncpa [#allocation3], 0
    %9 = vsyncpa [#allocation6], 0
    %10 = vsyncpa [#allocation4], 0
    // Predicated region
    $region2: #{tpu_custom_call.1} parent=1 // pred_check
      _
    $region3: #{tpu_custom_call.1} parent=1 // pred_check_branch
      %12 = sbr.rel (0) target = $region5
    $region4: #{tpu_custom_call.1} parent=1 // pred_region
      %s14 = ssub.s32 128, 128
      %15 = vsyncadd [#allocation3], %s14
      %s17 = sshll.u32 [#allocation2], 4
      %s18 = int_to_ptr.vmem [resolvable:$true] %s17
      %20 = dma.hbm_to_vmem [thread:$0]  %s0, 128, %s18, [#allocation3]
    $region5: #{tpu_custom_call.1} parent=1 // pred_fallthru
      _
    // Predicated region
    $region6: #{tpu_custom_call.1} parent=1 // pred_check
      _
    $region7: #{tpu_custom_call.1} parent=1 // pred_check_branch
      %22 = sbr.rel (0) target = $region9
    $region8: #{tpu_custom_call.1} parent=1 // pred_region
      %s24 = ssub.s32 8192, 8192
      %25 = vsyncadd [#allocation6], %s24
      %s26 = sshll.u32 [#allocation5], 4
      %s27 = int_to_ptr.vmem [resolvable:$true] %s26
      %32 = dma.hbm_to_vmem [thread:$0]  %s1, 8192, %s27, [#allocation6], 128, 128, 8
    $region9: #{tpu_custom_call.1} parent=1 // pred_fallthru
      _
    // Predicated region
    $region10: #{tpu_custom_call.1} parent=1 // pred_check
      _
    $region11: #{tpu_custom_call.1} parent=1 // pred_check_branch
      %34 = sbr.rel (0) target = $region13
    $region12: #{tpu_custom_call.1} parent=1 // pred_region
      %s36 = ssub.s32 64, 64
      %37 = vsyncadd [#allocation6], %s36
      %s38 = sshll.u32 [#allocation7], 4
      %s39 = int_to_ptr.vmem [resolvable:$true] %s38
      %44 = dma.hbm_to_vmem [thread:$0]  %s2, 64, %s39, [#allocation6], 16, 16, 1
    $region13: #{tpu_custom_call.1} parent=1 // pred_fallthru
      _
    // Predicated region
    $region14: #{tpu_custom_call.1} parent=1 // pred_check
      _
    $region15: #{tpu_custom_call.1} parent=1 // pred_check_branch
      %46 = sbr.rel (0) target = $region17
    $region16: #{tpu_custom_call.1} parent=1 // pred_region
      %47 = dma.done [#allocation3], 128
    $region17: #{tpu_custom_call.1} parent=1 // pred_fallthru
      _
    // Predicated region
    $region18: #{tpu_custom_call.1} parent=1 // pred_check
      _
    $region19: #{tpu_custom_call.1} parent=1 // pred_check_branch
      %49 = sbr.rel (0) target = $region21
    $region20: #{tpu_custom_call.1} parent=1 // pred_region
      %50 = dma.done [#allocation6], 8192
    $region21: #{tpu_custom_call.1} parent=1 // pred_fallthru
      _
    // Predicated region
    $region22: #{tpu_custom_call.1} parent=1 // pred_check
      _
    $region23: #{tpu_custom_call.1} parent=1 // pred_check_branch
      %52 = sbr.rel (0) target = $region25
    $region24: #{tpu_custom_call.1} parent=1 // pred_region
      %53 = dma.done [#allocation6], 64
    $region25: #{tpu_custom_call.1} parent=1 // pred_fallthru
      _
    %v54 = vld [vmem:[#allocation2] sm:$0xff]
    %v55 = vmul.f32 %v54, %v54
    %56 = vadd.xlane.f32.xlu0 %v55
    %v57 = vpop.xlane.xlu0 %56
    %v58 = vrsqrt.pop %v57
    %v59 = vmul.f32 %v57, %v58
    %vm60 = vcmp.eq.f32.partialorder %v57, inf
    %v61 = vsel %vm60, %v57, %v59
    %vm62 = vcmp.eq.f32.partialorder %v57, 0.0
    %v63 = vand.u32 %v57, 2147483648
    %v64 = vsel %vm62, %v63, %v61
    %v65 = vmax.f32 %v64, 1e-12
    %v66 = vrcp.pop %v65
    %v67 = vmul.f32 %v54, %v66
    %v68 = vld [vmem:[#allocation5] sm:$0xff]
    %v69 = vld [vmem:[#allocation5 + $0x8] sm:$0xff]
    %v70 = vld [vmem:[#allocation5 + $0x10] sm:$0xff]
    %v71 = vld [vmem:[#allocation5 + $0x18] sm:$0xff]
    %v72 = vld [vmem:[#allocation5 + $0x20] sm:$0xff]
    %v73 = vld [vmem:[#allocation5 + $0x28] sm:$0xff]
    %v74 = vld [vmem:[#allocation5 + $0x30] sm:$0xff]
    %v75 = vld [vmem:[#allocation5 + $0x38] sm:$0xff]
    %v76 = vld [vmem:[#allocation5 + $0x40] sm:$0xff]
    %v77 = vld [vmem:[#allocation5 + $0x48] sm:$0xff]
    %v78 = vld [vmem:[#allocation5 + $0x50] sm:$0xff]
    %v79 = vld [vmem:[#allocation5 + $0x58] sm:$0xff]
    %v80 = vld [vmem:[#allocation5 + $0x60] sm:$0xff]
    %v81 = vld [vmem:[#allocation5 + $0x68] sm:$0xff]
    %v82 = vld [vmem:[#allocation5 + $0x70] sm:$0xff]
    %v83 = vld [vmem:[#allocation5 + $0x78] sm:$0xff]
    %v84 = vld [vmem:[#allocation7] sm:$0x1]
    %v86 = vlaneseq
    %v87 = vshrl.u32 %v86, 7
    %v88 = vsub.s32 0, %v87
    %v89 = vrot.slane %v84, %v88
    %91 = vmatprep.subr.mxu0 0.0
    %92 = vmatpush1.msra.mxu0 %v83
    %93 = vmatprep.subr.mxu0 0.0
    %94 = vmatpush1.msra.mxu0 %v82
    %95 = vmatprep.subr.mxu0 0.0
    %96 = vmatpush1.msra.mxu0 %v81
    %97 = vmatprep.subr.mxu0 0.0
    %98 = vmatpush1.msra.mxu0 %v80
    %99 = vmatprep.subr.mxu0 0.0
    %100 = vmatpush1.msra.mxu0 %v79
    %101 = vmatprep.subr.mxu0 0.0
    %102 = vmatpush1.msra.mxu0 %v78
    %103 = vmatprep.subr.mxu0 0.0
    %104 = vmatpush1.msra.mxu0 %v77
    %105 = vmatprep.subr.mxu0 0.0
    %106 = vmatpush1.msra.mxu0 %v76
    %107 = vmatprep.subr.mxu0 0.0
    %108 = vmatpush1.msra.mxu0 %v75
    %109 = vmatprep.subr.mxu0 0.0
    %110 = vmatpush1.msra.mxu0 %v74
    %111 = vmatprep.subr.mxu0 0.0
    %112 = vmatpush1.msra.mxu0 %v73
    %113 = vmatprep.subr.mxu0 0.0
    %114 = vmatpush1.msra.mxu0 %v72
    %115 = vmatprep.subr.mxu0 0.0
    %116 = vmatpush1.msra.mxu0 %v71
    %117 = vmatprep.subr.mxu0 0.0
    %118 = vmatpush1.msra.mxu0 %v70
    %119 = vmatprep.subr.mxu0 0.0
    %120 = vmatpush1.msra.mxu0 %v69
    %121 = vmatprep.subr.mxu0 0.0
    %122 = vmatpush1.msra.mxu0 %v68
    %123 = vmatprep.subr.mxu0 0.0
    %124 = vmatpush2.msra.mxu0 0.0
    %125 = vmatprep.subr.mxu0 0.0
    %126 = vmatpush2.msra.mxu0 0.0
    %127 = vmatprep.subr.mxu0 0.0
    %128 = vmatpush2.msra.mxu0 0.0
    %129 = vmatprep.subr.mxu0 0.0
    %130 = vmatpush2.msra.mxu0 0.0
    %131 = vmatprep.subr.mxu0 0.0
    %132 = vmatpush2.msra.mxu0 0.0
    %133 = vmatprep.subr.mxu0 0.0
    %134 = vmatpush2.msra.mxu0 0.0
    %135 = vmatprep.subr.mxu0 0.0
    %136 = vmatpush2.msra.mxu0 0.0
    %137 = vmatprep.subr.mxu0 0.0
    %138 = vmatpush2.msra.mxu0 0.0
    %139 = vmatprep.subr.mxu0 0.0
    %140 = vmatpush2.msra.mxu0 0.0
    %141 = vmatprep.subr.mxu0 0.0
    %142 = vmatpush2.msra.mxu0 0.0
    %143 = vmatprep.subr.mxu0 0.0
    %144 = vmatpush2.msra.mxu0 0.0
    %145 = vmatprep.subr.mxu0 0.0
    %146 = vmatpush2.msra.mxu0 0.0
    %147 = vmatprep.subr.mxu0 0.0
    %148 = vmatpush2.msra.mxu0 0.0
    %149 = vmatprep.subr.mxu0 0.0
    %150 = vmatpush2.msra.mxu0 0.0
    %151 = vmatprep.subr.mxu0 0.0
    %152 = vmatpush2.msra.mxu0 0.0
    %153 = vmatprep.subr.mxu0 0.0
    %154 = vmatpush2.msra.mxu0 0.0
    %155 = vmatprep.mubr.f32.mxu0 0.0
    %156 = vmatmul.mubr.f32.gmra.mxu0 %v67
    %v157 = vpop.f32.mrf.mxu0
    %v158 = vadd.f32 %v89, %v157
    %v159 = vpop.f32.mrf.mxu0
    %160 = vdwg.mxu0
    %v161 = vmul.f32 %v158, 0.2
    %v162 = vmax.f32 %v158, %v161
    %s163 = scalar_lea.vmem [#allocation5], 128
    %v164 = vld [vmem:[%s163] sm:$0xff]
    %v165 = vld [vmem:[%s163 + $0x8] sm:$0xff]
    %v166 = vld [vmem:[%s163 + $0x10] sm:$0xff]
    %v167 = vld [vmem:[%s163 + $0x18] sm:$0xff]
    %v168 = vld [vmem:[%s163 + $0x20] sm:$0xff]
    %v169 = vld [vmem:[%s163 + $0x28] sm:$0xff]
    %v170 = vld [vmem:[%s163 + $0x30] sm:$0xff]
    %v171 = vld [vmem:[%s163 + $0x38] sm:$0xff]
    %v172 = vld [vmem:[%s163 + $0x40] sm:$0xff]
    %v173 = vld [vmem:[%s163 + $0x48] sm:$0xff]
    %v174 = vld [vmem:[%s163 + $0x50] sm:$0xff]
    %v175 = vld [vmem:[%s163 + $0x58] sm:$0xff]
    %v176 = vld [vmem:[%s163 + $0x60] sm:$0xff]
    %v177 = vld [vmem:[%s163 + $0x68] sm:$0xff]
    %v178 = vld [vmem:[%s163 + $0x70] sm:$0xff]
    %v179 = vld [vmem:[%s163 + $0x78] sm:$0xff]
    %s180 = scalar_lea.vmem [#allocation7], 1
    %v181 = vld [vmem:[%s180] sm:$0x1]
    %v183 = vlaneseq
    %v184 = vshrl.u32 %v183, 7
    %v185 = vsub.s32 0, %v184
    %v186 = vrot.slane %v181, %v185
    %188 = vmatprep.subr.mxu0 0.0
    %189 = vmatpush1.msra.mxu0 %v179
    %190 = vmatprep.subr.mxu0 0.0
    %191 = vmatpush1.msra.mxu0 %v178
    %192 = vmatprep.subr.mxu0 0.0
    %193 = vmatpush1.msra.mxu0 %v177
    %194 = vmatprep.subr.mxu0 0.0
    %195 = vmatpush1.msra.mxu0 %v176
    %196 = vmatprep.subr.mxu0 0.0
    %197 = vmatpush1.msra.mxu0 %v175
    %198 = vmatprep.subr.mxu0 0.0
    %199 = vmatpush1.msra.mxu0 %v174
    %200 = vmatprep.subr.mxu0 0.0
    %201 = vmatpush1.msra.mxu0 %v173
    %202 = vmatprep.subr.mxu0 0.0
    %203 = vmatpush1.msra.mxu0 %v172
    %204 = vmatprep.subr.mxu0 0.0
    %205 = vmatpush1.msra.mxu0 %v171
    %206 = vmatprep.subr.mxu0 0.0
    %207 = vmatpush1.msra.mxu0 %v170
    %208 = vmatprep.subr.mxu0 0.0
    %209 = vmatpush1.msra.mxu0 %v169
    %210 = vmatprep.subr.mxu0 0.0
    %211 = vmatpush1.msra.mxu0 %v168
    %212 = vmatprep.subr.mxu0 0.0
    %213 = vmatpush1.msra.mxu0 %v167
    %214 = vmatprep.subr.mxu0 0.0
    %215 = vmatpush1.msra.mxu0 %v166
    %216 = vmatprep.subr.mxu0 0.0
    %217 = vmatpush1.msra.mxu0 %v165
    %218 = vmatprep.subr.mxu0 0.0
    %219 = vmatpush1.msra.mxu0 %v164
    %220 = vmatprep.subr.mxu0 0.0
    %221 = vmatpush2.msra.mxu0 0.0
    %222 = vmatprep.subr.mxu0 0.0
    %223 = vmatpush2.msra.mxu0 0.0
    %224 = vmatprep.subr.mxu0 0.0
    %225 = vmatpush2.msra.mxu0 0.0
    %226 = vmatprep.subr.mxu0 0.0
    %227 = vmatpush2.msra.mxu0 0.0
    %228 = vmatprep.subr.mxu0 0.0
    %229 = vmatpush2.msra.mxu0 0.0
    %230 = vmatprep.subr.mxu0 0.0
    %231 = vmatpush2.msra.mxu0 0.0
    %232 = vmatprep.subr.mxu0 0.0
    %233 = vmatpush2.msra.mxu0 0.0
    %234 = vmatprep.subr.mxu0 0.0
    %235 = vmatpush2.msra.mxu0 0.0
    %236 = vmatprep.subr.mxu0 0.0
    %237 = vmatpush2.msra.mxu0 0.0
    %238 = vmatprep.subr.mxu0 0.0
    %239 = vmatpush2.msra.mxu0 0.0
    %240 = vmatprep.subr.mxu0 0.0
    %241 = vmatpush2.msra.mxu0 0.0
    %242 = vmatprep.subr.mxu0 0.0
    %243 = vmatpush2.msra.mxu0 0.0
    %244 = vmatprep.subr.mxu0 0.0
    %245 = vmatpush2.msra.mxu0 0.0
    %246 = vmatprep.subr.mxu0 0.0
    %247 = vmatpush2.msra.mxu0 0.0
    %248 = vmatprep.subr.mxu0 0.0
    %249 = vmatpush2.msra.mxu0 0.0
    %250 = vmatprep.subr.mxu0 0.0
    %251 = vmatpush2.msra.mxu0 0.0
    %252 = vmatprep.mubr.f32.mxu0 0.0
    %253 = vmatmul.mubr.f32.gmra.mxu0 %v162
    %v254 = vpop.f32.mrf.mxu0
    %v255 = vadd.f32 %v186, %v254
    %v256 = vpop.f32.mrf.mxu0
    %257 = vdwg.mxu0
    %v258 = vmul.f32 %v255, 0.2
    %v259 = vmax.f32 %v255, %v258
    %s260 = scalar_lea.vmem [#allocation5], 256
    %v261 = vld [vmem:[%s260] sm:$0xff]
    %v262 = vld [vmem:[%s260 + $0x8] sm:$0xff]
    %v263 = vld [vmem:[%s260 + $0x10] sm:$0xff]
    %v264 = vld [vmem:[%s260 + $0x18] sm:$0xff]
    %v265 = vld [vmem:[%s260 + $0x20] sm:$0xff]
    %v266 = vld [vmem:[%s260 + $0x28] sm:$0xff]
    %v267 = vld [vmem:[%s260 + $0x30] sm:$0xff]
    %v268 = vld [vmem:[%s260 + $0x38] sm:$0xff]
    %v269 = vld [vmem:[%s260 + $0x40] sm:$0xff]
    %v270 = vld [vmem:[%s260 + $0x48] sm:$0xff]
    %v271 = vld [vmem:[%s260 + $0x50] sm:$0xff]
    %v272 = vld [vmem:[%s260 + $0x58] sm:$0xff]
    %v273 = vld [vmem:[%s260 + $0x60] sm:$0xff]
    %v274 = vld [vmem:[%s260 + $0x68] sm:$0xff]
    %v275 = vld [vmem:[%s260 + $0x70] sm:$0xff]
    %v276 = vld [vmem:[%s260 + $0x78] sm:$0xff]
    %s277 = scalar_lea.vmem [#allocation7], 2
    %v278 = vld [vmem:[%s277] sm:$0x1]
    %v280 = vlaneseq
    %v281 = vshrl.u32 %v280, 7
    %v282 = vsub.s32 0, %v281
    %v283 = vrot.slane %v278, %v282
    %285 = vmatprep.subr.mxu0 0.0
    %286 = vmatpush1.msra.mxu0 %v276
    %287 = vmatprep.subr.mxu0 0.0
    %288 = vmatpush1.msra.mxu0 %v275
    %289 = vmatprep.subr.mxu0 0.0
    %290 = vmatpush1.msra.mxu0 %v274
    %291 = vmatprep.subr.mxu0 0.0
    %292 = vmatpush1.msra.mxu0 %v273
    %293 = vmatprep.subr.mxu0 0.0
    %294 = vmatpush1.msra.mxu0 %v272
    %295 = vmatprep.subr.mxu0 0.0
    %296 = vmatpush1.msra.mxu0 %v271
    %297 = vmatprep.subr.mxu0 0.0
    %298 = vmatpush1.msra.mxu0 %v270
    %299 = vmatprep.subr.mxu0 0.0
    %300 = vmatpush1.msra.mxu0 %v269
    %301 = vmatprep.subr.mxu0 0.0
    %302 = vmatpush1.msra.mxu0 %v268
    %303 = vmatprep.subr.mxu0 0.0
    %304 = vmatpush1.msra.mxu0 %v267
    %305 = vmatprep.subr.mxu0 0.0
    %306 = vmatpush1.msra.mxu0 %v266
    %307 = vmatprep.subr.mxu0 0.0
    %308 = vmatpush1.msra.mxu0 %v265
    %309 = vmatprep.subr.mxu0 0.0
    %310 = vmatpush1.msra.mxu0 %v264
    %311 = vmatprep.subr.mxu0 0.0
    %312 = vmatpush1.msra.mxu0 %v263
    %313 = vmatprep.subr.mxu0 0.0
    %314 = vmatpush1.msra.mxu0 %v262
    %315 = vmatprep.subr.mxu0 0.0
    %316 = vmatpush1.msra.mxu0 %v261
    %317 = vmatprep.subr.mxu0 0.0
    %318 = vmatpush2.msra.mxu0 0.0
    %319 = vmatprep.subr.mxu0 0.0
    %320 = vmatpush2.msra.mxu0 0.0
    %321 = vmatprep.subr.mxu0 0.0
    %322 = vmatpush2.msra.mxu0 0.0
    %323 = vmatprep.subr.mxu0 0.0
    %324 = vmatpush2.msra.mxu0 0.0
    %325 = vmatprep.subr.mxu0 0.0
    %326 = vmatpush2.msra.mxu0 0.0
    %327 = vmatprep.subr.mxu0 0.0
    %328 = vmatpush2.msra.mxu0 0.0
    %329 = vmatprep.subr.mxu0 0.0
    %330 = vmatpush2.msra.mxu0 0.0
    %331 = vmatprep.subr.mxu0 0.0
    %332 = vmatpush2.msra.mxu0 0.0
    %333 = vmatprep.subr.mxu0 0.0
    %334 = vmatpush2.msra.mxu0 0.0
    %335 = vmatprep.subr.mxu0 0.0
    %336 = vmatpush2.msra.mxu0 0.0
    %337 = vmatprep.subr.mxu0 0.0
    %338 = vmatpush2.msra.mxu0 0.0
    %339 = vmatprep.subr.mxu0 0.0
    %340 = vmatpush2.msra.mxu0 0.0
    %341 = vmatprep.subr.mxu0 0.0
    %342 = vmatpush2.msra.mxu0 0.0
    %343 = vmatprep.subr.mxu0 0.0
    %344 = vmatpush2.msra.mxu0 0.0
    %345 = vmatprep.subr.mxu0 0.0
    %346 = vmatpush2.msra.mxu0 0.0
    %347 = vmatprep.subr.mxu0 0.0
    %348 = vmatpush2.msra.mxu0 0.0
    %349 = vmatprep.mubr.f32.mxu0 0.0
    %350 = vmatmul.mubr.f32.gmra.mxu0 %v259
    %v351 = vpop.f32.mrf.mxu0
    %v352 = vadd.f32 %v283, %v351
    %v353 = vpop.f32.mrf.mxu0
    %354 = vdwg.mxu0
    %v355 = vmul.f32 %v352, 0.2
    %v356 = vmax.f32 %v352, %v355
    %s357 = scalar_lea.vmem [#allocation5], 384
    %v358 = vld [vmem:[%s357] sm:$0xff]
    %v359 = vld [vmem:[%s357 + $0x8] sm:$0xff]
    %v360 = vld [vmem:[%s357 + $0x10] sm:$0xff]
    %v361 = vld [vmem:[%s357 + $0x18] sm:$0xff]
    %v362 = vld [vmem:[%s357 + $0x20] sm:$0xff]
    %v363 = vld [vmem:[%s357 + $0x28] sm:$0xff]
    %v364 = vld [vmem:[%s357 + $0x30] sm:$0xff]
    %v365 = vld [vmem:[%s357 + $0x38] sm:$0xff]
    %v366 = vld [vmem:[%s357 + $0x40] sm:$0xff]
    %v367 = vld [vmem:[%s357 + $0x48] sm:$0xff]
    %v368 = vld [vmem:[%s357 + $0x50] sm:$0xff]
    %v369 = vld [vmem:[%s357 + $0x58] sm:$0xff]
    %v370 = vld [vmem:[%s357 + $0x60] sm:$0xff]
    %v371 = vld [vmem:[%s357 + $0x68] sm:$0xff]
    %v372 = vld [vmem:[%s357 + $0x70] sm:$0xff]
    %v373 = vld [vmem:[%s357 + $0x78] sm:$0xff]
    %s374 = scalar_lea.vmem [#allocation7], 3
    %v375 = vld [vmem:[%s374] sm:$0x1]
    %v377 = vlaneseq
    %v378 = vshrl.u32 %v377, 7
    %v379 = vsub.s32 0, %v378
    %v380 = vrot.slane %v375, %v379
    %382 = vmatprep.subr.mxu0 0.0
    %383 = vmatpush1.msra.mxu0 %v373
    %384 = vmatprep.subr.mxu0 0.0
    %385 = vmatpush1.msra.mxu0 %v372
    %386 = vmatprep.subr.mxu0 0.0
    %387 = vmatpush1.msra.mxu0 %v371
    %388 = vmatprep.subr.mxu0 0.0
    %389 = vmatpush1.msra.mxu0 %v370
    %390 = vmatprep.subr.mxu0 0.0
    %391 = vmatpush1.msra.mxu0 %v369
    %392 = vmatprep.subr.mxu0 0.0
    %393 = vmatpush1.msra.mxu0 %v368
    %394 = vmatprep.subr.mxu0 0.0
    %395 = vmatpush1.msra.mxu0 %v367
    %396 = vmatprep.subr.mxu0 0.0
    %397 = vmatpush1.msra.mxu0 %v366
    %398 = vmatprep.subr.mxu0 0.0
    %399 = vmatpush1.msra.mxu0 %v365
    %400 = vmatprep.subr.mxu0 0.0
    %401 = vmatpush1.msra.mxu0 %v364
    %402 = vmatprep.subr.mxu0 0.0
    %403 = vmatpush1.msra.mxu0 %v363
    %404 = vmatprep.subr.mxu0 0.0
    %405 = vmatpush1.msra.mxu0 %v362
    %406 = vmatprep.subr.mxu0 0.0
    %407 = vmatpush1.msra.mxu0 %v361
    %408 = vmatprep.subr.mxu0 0.0
    %409 = vmatpush1.msra.mxu0 %v360
    %410 = vmatprep.subr.mxu0 0.0
    %411 = vmatpush1.msra.mxu0 %v359
    %412 = vmatprep.subr.mxu0 0.0
    %413 = vmatpush1.msra.mxu0 %v358
    %414 = vmatprep.subr.mxu0 0.0
    %415 = vmatpush2.msra.mxu0 0.0
    %416 = vmatprep.subr.mxu0 0.0
    %417 = vmatpush2.msra.mxu0 0.0
    %418 = vmatprep.subr.mxu0 0.0
    %419 = vmatpush2.msra.mxu0 0.0
    %420 = vmatprep.subr.mxu0 0.0
    %421 = vmatpush2.msra.mxu0 0.0
    %422 = vmatprep.subr.mxu0 0.0
    %423 = vmatpush2.msra.mxu0 0.0
    %424 = vmatprep.subr.mxu0 0.0
    %425 = vmatpush2.msra.mxu0 0.0
    %426 = vmatprep.subr.mxu0 0.0
    %427 = vmatpush2.msra.mxu0 0.0
    %428 = vmatprep.subr.mxu0 0.0
    %429 = vmatpush2.msra.mxu0 0.0
    %430 = vmatprep.subr.mxu0 0.0
    %431 = vmatpush2.msra.mxu0 0.0
    %432 = vmatprep.subr.mxu0 0.0
    %433 = vmatpush2.msra.mxu0 0.0
    %434 = vmatprep.subr.mxu0 0.0
    %435 = vmatpush2.msra.mxu0 0.0
    %436 = vmatprep.subr.mxu0 0.0
    %437 = vmatpush2.msra.mxu0 0.0
    %438 = vmatprep.subr.mxu0 0.0
    %439 = vmatpush2.msra.mxu0 0.0
    %440 = vmatprep.subr.mxu0 0.0
    %441 = vmatpush2.msra.mxu0 0.0
    %442 = vmatprep.subr.mxu0 0.0
    %443 = vmatpush2.msra.mxu0 0.0
    %444 = vmatprep.subr.mxu0 0.0
    %445 = vmatpush2.msra.mxu0 0.0
    %446 = vmatprep.mubr.f32.mxu0 0.0
    %447 = vmatmul.mubr.f32.gmra.mxu0 %v356
    %v448 = vpop.f32.mrf.mxu0
    %v449 = vadd.f32 %v380, %v448
    %v450 = vpop.f32.mrf.mxu0
    %451 = vdwg.mxu0
    %v452 = vmul.f32 %v449, 0.2
    %v453 = vmax.f32 %v449, %v452
    %454 = vst [vmem:[#allocation8] sm:$0xff] %v453
    // Predicated region
    $region26: #{tpu_custom_call.1} parent=1 // pred_check
      _
    $region27: #{tpu_custom_call.1} parent=1 // pred_check_branch
      %456 = sbr.rel (0) target = $region29
    $region28: #{tpu_custom_call.1} parent=1 // pred_region
      %s458 = ssub.s32 128, 128
      %459 = vsyncadd [#allocation4], %s458
      %s461 = sshll.u32 [#allocation8], 4
      %s462 = int_to_ptr.vmem [resolvable:$true] %s461
      %464 = dma.vmem_to_hbm [thread:$0]  %s462, 128, %s3, [#allocation4]
    $region29: #{tpu_custom_call.1} parent=1 // pred_fallthru
      _
    // Predicated region
    $region30: #{tpu_custom_call.1} parent=1 // pred_check
      _
    $region31: #{tpu_custom_call.1} parent=1 // pred_check_branch
      %466 = sbr.rel (0) target = $region33
    $region32: #{tpu_custom_call.1} parent=1 // pred_region
      %467 = dma.done [#allocation4], 128
    $region33: #{tpu_custom_call.1} parent=1 // pred_fallthru
      _
    %468 = vsyncpa [#allocation3], 1
    %469 = vsyncpa [#allocation6], 1
    %470 = vsyncpa [#allocation4], 1

// kernel: tpu_custom_call.1
$region0: #{tpu_custom_call.1}
  #allocation0 [shape = 'u32[]', space=smem, size = 0x4, offset = 0x4, fixed_abs, tag = 'smem constant byte address 0x4 - core index']
  #allocation1 [shape = 'u32[144,128]{1,0:T(1,128)}', space=vmem, size = 0x12000, scoped, tag = 'internal scratch']
  %s0 = inlined_call_operand.hbm [shape: f32[8,128], index: 0, kind: input, shape index: {}]
  %s1 = inlined_call_operand.hbm [shape: f32[4,128,128], index: 1, kind: input, shape index: {}]
  %s2 = inlined_call_operand.hbm [shape: f32[4,1,128], index: 2, kind: input, shape index: {}]
  %s3 = inlined_call_operand.hbm [shape: f32[8,128], index: 3, kind: output, shape index: {}]
  %s4 = sld [smem:[#allocation0]]
  $region34: #{tpu_custom_call.1} parent=0
    _
  %s6 = ssub.s32 1, %s4
  %s7 = scalar_select 0, %s6, %s4
  $region1: #{tpu_custom_call.1} parent=0
    #allocation2 [shape = 'u8[4096]{0}', space=vmem, size = 0x1000, scoped, tag = 'input window, operand 0, single buffered']
    #allocation3 [shape = 's32[1]{0}', space=sflag, size = 0x4, scoped, tag = 'scoped memory for tpu_custom_call.1']
    #allocation4 [shape = 's32[1]{0}', space=sflag, size = 0x4, scoped, tag = 'scoped memory for tpu_custom_call.1']
    #allocation5 [shape = 'u8[262144]{0}', space=vmem, size = 0x40000, scoped, tag = 'input window, operand 1, single buffered']
    #allocation6 [shape = 's32[1]{0}', space=sflag, size = 0x4, scoped, tag = 'scoped memory for tpu_custom_call.1']
    #allocation7 [shape = 'u8[2048]{0}', space=vmem, size = 0x800, scoped, tag = 'input window, operand 2, single buffered']
    #allocation8 [shape = 'u8[4096]{0}', space=vmem, size = 0x1000, scoped, tag = 'output window, operand 0, single buffered']
    %8 = vsyncpa [#allocation3], 0
    %9 = vsyncpa [#allocation6], 0
    %10 = vsyncpa [#allocation4], 0
    // Predicated region
    $region2: #{tpu_custom_call.1} parent=1 // pred_check
      _
    $region3: #{tpu_custom_call.1} parent=1 // pred_check_branch
      %12 = sbr.rel (0) target = $region5
    $region4: #{tpu_custom_call.1} parent=1 // pred_region
      %s14 = ssub.s32 128, 128
      %15 = vsyncadd [#allocation3], %s14
      %s17 = sshll.u32 [#allocation2], 4
      %s18 = int_to_ptr.vmem [resolvable:$true] %s17
      %20 = dma.hbm_to_vmem [thread:$0]  %s0, 128, %s18, [#allocation3]
    $region5: #{tpu_custom_call.1} parent=1 // pred_fallthru
      _
    // Predicated region
    $region6: #{tpu_custom_call.1} parent=1 // pred_check
      _
    $region7: #{tpu_custom_call.1} parent=1 // pred_check_branch
      %22 = sbr.rel (0) target = $region9
    $region8: #{tpu_custom_call.1} parent=1 // pred_region
      %s24 = ssub.s32 8192, 8192
      %25 = vsyncadd [#allocation6], %s24
      %s26 = sshll.u32 [#allocation5], 4
      %s27 = int_to_ptr.vmem [resolvable:$true] %s26
      %32 = dma.hbm_to_vmem [thread:$0]  %s1, 8192, %s27, [#allocation6], 128, 128, 8
    $region9: #{tpu_custom_call.1} parent=1 // pred_fallthru
      _
    // Predicated region
    $region10: #{tpu_custom_call.1} parent=1 // pred_check
      _
    $region11: #{tpu_custom_call.1} parent=1 // pred_check_branch
      %34 = sbr.rel (0) target = $region13
    $region12: #{tpu_custom_call.1} parent=1 // pred_region
      %s36 = ssub.s32 64, 64
      %37 = vsyncadd [#allocation6], %s36
      %s38 = sshll.u32 [#allocation7], 4
      %s39 = int_to_ptr.vmem [resolvable:$true] %s38
      %44 = dma.hbm_to_vmem [thread:$0]  %s2, 64, %s39, [#allocation6], 16, 16, 1
    $region13: #{tpu_custom_call.1} parent=1 // pred_fallthru
      _
    // Predicated region
    $region14: #{tpu_custom_call.1} parent=1 // pred_check
      _
    $region15: #{tpu_custom_call.1} parent=1 // pred_check_branch
      %46 = sbr.rel (0) target = $region17
    $region16: #{tpu_custom_call.1} parent=1 // pred_region
      %47 = dma.done [#allocation3], 128
    $region17: #{tpu_custom_call.1} parent=1 // pred_fallthru
      _
    // Predicated region
    $region18: #{tpu_custom_call.1} parent=1 // pred_check
      _
    $region19: #{tpu_custom_call.1} parent=1 // pred_check_branch
      %49 = sbr.rel (0) target = $region21
    $region20: #{tpu_custom_call.1} parent=1 // pred_region
      %50 = dma.done [#allocation6], 8192
    $region21: #{tpu_custom_call.1} parent=1 // pred_fallthru
      _
    // Predicated region
    $region22: #{tpu_custom_call.1} parent=1 // pred_check
      _
    $region23: #{tpu_custom_call.1} parent=1 // pred_check_branch
      %52 = sbr.rel (0) target = $region25
    $region24: #{tpu_custom_call.1} parent=1 // pred_region
      %53 = dma.done [#allocation6], 64
    $region25: #{tpu_custom_call.1} parent=1 // pred_fallthru
      _
    %v54 = vld [vmem:[#allocation2] sm:$0xff]
    %v55 = vmul.f32 %v54, %v54
    %56 = vadd.xlane.f32.xlu0 %v55
    %v57 = vpop.xlane.xlu0 %56
    %v58 = vrsqrt.pop %v57
    %v59 = vmul.f32 %v57, %v58
    %vm60 = vcmp.eq.f32.partialorder %v57, inf
    %v61 = vsel %vm60, %v57, %v59
    %vm62 = vcmp.eq.f32.partialorder %v57, 0.0
    %v63 = vand.u32 %v57, 2147483648
    %v64 = vsel %vm62, %v63, %v61
    %v65 = vmax.f32 %v64, 1e-12
    %v66 = vrcp.pop %v65
    %v67 = vmul.f32 %v54, %v66
    %v68 = vld [vmem:[#allocation5] sm:$0xff]
    %v69 = vld [vmem:[#allocation5 + $0x8] sm:$0xff]
    %v70 = vld [vmem:[#allocation5 + $0x10] sm:$0xff]
    %v71 = vld [vmem:[#allocation5 + $0x18] sm:$0xff]
    %v72 = vld [vmem:[#allocation5 + $0x20] sm:$0xff]
    %v73 = vld [vmem:[#allocation5 + $0x28] sm:$0xff]
    %v74 = vld [vmem:[#allocation5 + $0x30] sm:$0xff]
    %v75 = vld [vmem:[#allocation5 + $0x38] sm:$0xff]
    %v76 = vld [vmem:[#allocation5 + $0x40] sm:$0xff]
    %v77 = vld [vmem:[#allocation5 + $0x48] sm:$0xff]
    %v78 = vld [vmem:[#allocation5 + $0x50] sm:$0xff]
    %v79 = vld [vmem:[#allocation5 + $0x58] sm:$0xff]
    %v80 = vld [vmem:[#allocation5 + $0x60] sm:$0xff]
    %v81 = vld [vmem:[#allocation5 + $0x68] sm:$0xff]
    %v82 = vld [vmem:[#allocation5 + $0x70] sm:$0xff]
    %v83 = vld [vmem:[#allocation5 + $0x78] sm:$0xff]
    %v84 = vld [vmem:[#allocation7] sm:$0x1]
    %v86 = vlaneseq
    %v87 = vshrl.u32 %v86, 7
    %v88 = vsub.s32 0, %v87
    %v89 = vrot.slane %v84, %v88
    %91 = vmatprep.subr.mxu0 0.0
    %92 = vmatpush1.msra.mxu0 %v83
    %93 = vmatprep.subr.mxu0 0.0
    %94 = vmatpush1.msra.mxu0 %v82
    %95 = vmatprep.subr.mxu0 0.0
    %96 = vmatpush1.msra.mxu0 %v81
    %97 = vmatprep.subr.mxu0 0.0
    %98 = vmatpush1.msra.mxu0 %v80
    %99 = vmatprep.subr.mxu0 0.0
    %100 = vmatpush1.msra.mxu0 %v79
    %101 = vmatprep.subr.mxu0 0.0
    %102 = vmatpush1.msra.mxu0 %v78
    %103 = vmatprep.subr.mxu0 0.0
    %104 = vmatpush1.msra.mxu0 %v77
    %105 = vmatprep.subr.mxu0 0.0
    %106 = vmatpush1.msra.mxu0 %v76
    %107 = vmatprep.subr.mxu0 0.0
    %108 = vmatpush1.msra.mxu0 %v75
    %109 = vmatprep.subr.mxu0 0.0
    %110 = vmatpush1.msra.mxu0 %v74
    %111 = vmatprep.subr.mxu0 0.0
    %112 = vmatpush1.msra.mxu0 %v73
    %113 = vmatprep.subr.mxu0 0.0
    %114 = vmatpush1.msra.mxu0 %v72
    %115 = vmatprep.subr.mxu0 0.0
    %116 = vmatpush1.msra.mxu0 %v71
    %117 = vmatprep.subr.mxu0 0.0
    %118 = vmatpush1.msra.mxu0 %v70
    %119 = vmatprep.subr.mxu0 0.0
    %120 = vmatpush1.msra.mxu0 %v69
    %121 = vmatprep.subr.mxu0 0.0
    %122 = vmatpush1.msra.mxu0 %v68
    %123 = vmatprep.subr.mxu0 0.0
    %124 = vmatpush2.msra.mxu0 0.0
    %125 = vmatprep.subr.mxu0 0.0
    %126 = vmatpush2.msra.mxu0 0.0
    %127 = vmatprep.subr.mxu0 0.0
    %128 = vmatpush2.msra.mxu0 0.0
    %129 = vmatprep.subr.mxu0 0.0
    %130 = vmatpush2.msra.mxu0 0.0
    %131 = vmatprep.subr.mxu0 0.0
    %132 = vmatpush2.msra.mxu0 0.0
    %133 = vmatprep.subr.mxu0 0.0
    %134 = vmatpush2.msra.mxu0 0.0
    %135 = vmatprep.subr.mxu0 0.0
    %136 = vmatpush2.msra.mxu0 0.0
    %137 = vmatprep.subr.mxu0 0.0
    %138 = vmatpush2.msra.mxu0 0.0
    %139 = vmatprep.subr.mxu0 0.0
    %140 = vmatpush2.msra.mxu0 0.0
    %141 = vmatprep.subr.mxu0 0.0
    %142 = vmatpush2.msra.mxu0 0.0
    %143 = vmatprep.subr.mxu0 0.0
    %144 = vmatpush2.msra.mxu0 0.0
    %145 = vmatprep.subr.mxu0 0.0
    %146 = vmatpush2.msra.mxu0 0.0
    %147 = vmatprep.subr.mxu0 0.0
    %148 = vmatpush2.msra.mxu0 0.0
    %149 = vmatprep.subr.mxu0 0.0
    %150 = vmatpush2.msra.mxu0 0.0
    %151 = vmatprep.subr.mxu0 0.0
    %152 = vmatpush2.msra.mxu0 0.0
    %153 = vmatprep.subr.mxu0 0.0
    %154 = vmatpush2.msra.mxu0 0.0
    %155 = vmatprep.mubr.f32.mxu0 0.0
    %156 = vmatmul.mubr.f32.gmra.mxu0 %v67
    %v157 = vpop.f32.mrf.mxu0
    %v158 = vadd.f32 %v89, %v157
    %v159 = vpop.f32.mrf.mxu0
    %160 = vdwg.mxu0
    %v161 = vmul.f32 %v158, 0.2
    %v162 = vmax.f32 %v158, %v161
    %s163 = scalar_lea.vmem [#allocation5], 128
    %v164 = vld [vmem:[%s163] sm:$0xff]
    %v165 = vld [vmem:[%s163 + $0x8] sm:$0xff]
    %v166 = vld [vmem:[%s163 + $0x10] sm:$0xff]
    %v167 = vld [vmem:[%s163 + $0x18] sm:$0xff]
    %v168 = vld [vmem:[%s163 + $0x20] sm:$0xff]
    %v169 = vld [vmem:[%s163 + $0x28] sm:$0xff]
    %v170 = vld [vmem:[%s163 + $0x30] sm:$0xff]
    %v171 = vld [vmem:[%s163 + $0x38] sm:$0xff]
    %v172 = vld [vmem:[%s163 + $0x40] sm:$0xff]
    %v173 = vld [vmem:[%s163 + $0x48] sm:$0xff]
    %v174 = vld [vmem:[%s163 + $0x50] sm:$0xff]
    %v175 = vld [vmem:[%s163 + $0x58] sm:$0xff]
    %v176 = vld [vmem:[%s163 + $0x60] sm:$0xff]
    %v177 = vld [vmem:[%s163 + $0x68] sm:$0xff]
    %v178 = vld [vmem:[%s163 + $0x70] sm:$0xff]
    %v179 = vld [vmem:[%s163 + $0x78] sm:$0xff]
    %s180 = scalar_lea.vmem [#allocation7], 1
    %v181 = vld [vmem:[%s180] sm:$0x1]
    %v183 = vlaneseq
    %v184 = vshrl.u32 %v183, 7
    %v185 = vsub.s32 0, %v184
    %v186 = vrot.slane %v181, %v185
    %188 = vmatprep.subr.mxu0 0.0
    %189 = vmatpush1.msra.mxu0 %v179
    %190 = vmatprep.subr.mxu0 0.0
    %191 = vmatpush1.msra.mxu0 %v178
    %192 = vmatprep.subr.mxu0 0.0
    %193 = vmatpush1.msra.mxu0 %v177
    %194 = vmatprep.subr.mxu0 0.0
    %195 = vmatpush1.msra.mxu0 %v176
    %196 = vmatprep.subr.mxu0 0.0
    %197 = vmatpush1.msra.mxu0 %v175
    %198 = vmatprep.subr.mxu0 0.0
    %199 = vmatpush1.msra.mxu0 %v174
    %200 = vmatprep.subr.mxu0 0.0
    %201 = vmatpush1.msra.mxu0 %v173
    %202 = vmatprep.subr.mxu0 0.0
    %203 = vmatpush1.msra.mxu0 %v172
    %204 = vmatprep.subr.mxu0 0.0
    %205 = vmatpush1.msra.mxu0 %v171
    %206 = vmatprep.subr.mxu0 0.0
    %207 = vmatpush1.msra.mxu0 %v170
    %208 = vmatprep.subr.mxu0 0.0
    %209 = vmatpush1.msra.mxu0 %v169
    %210 = vmatprep.subr.mxu0 0.0
    %211 = vmatpush1.msra.mxu0 %v168
    %212 = vmatprep.subr.mxu0 0.0
    %213 = vmatpush1.msra.mxu0 %v167
    %214 = vmatprep.subr.mxu0 0.0
    %215 = vmatpush1.msra.mxu0 %v166
    %216 = vmatprep.subr.mxu0 0.0
    %217 = vmatpush1.msra.mxu0 %v165
    %218 = vmatprep.subr.mxu0 0.0
    %219 = vmatpush1.msra.mxu0 %v164
    %220 = vmatprep.subr.mxu0 0.0
    %221 = vmatpush2.msra.mxu0 0.0
    %222 = vmatprep.subr.mxu0 0.0
    %223 = vmatpush2.msra.mxu0 0.0
    %224 = vmatprep.subr.mxu0 0.0
    %225 = vmatpush2.msra.mxu0 0.0
    %226 = vmatprep.subr.mxu0 0.0
    %227 = vmatpush2.msra.mxu0 0.0
    %228 = vmatprep.subr.mxu0 0.0
    %229 = vmatpush2.msra.mxu0 0.0
    %230 = vmatprep.subr.mxu0 0.0
    %231 = vmatpush2.msra.mxu0 0.0
    %232 = vmatprep.subr.mxu0 0.0
    %233 = vmatpush2.msra.mxu0 0.0
    %234 = vmatprep.subr.mxu0 0.0
    %235 = vmatpush2.msra.mxu0 0.0
    %236 = vmatprep.subr.mxu0 0.0
    %237 = vmatpush2.msra.mxu0 0.0
    %238 = vmatprep.subr.mxu0 0.0
    %239 = vmatpush2.msra.mxu0 0.0
    %240 = vmatprep.subr.mxu0 0.0
    %241 = vmatpush2.msra.mxu0 0.0
    %242 = vmatprep.subr.mxu0 0.0
    %243 = vmatpush2.msra.mxu0 0.0
    %244 = vmatprep.subr.mxu0 0.0
    %245 = vmatpush2.msra.mxu0 0.0
    %246 = vmatprep.subr.mxu0 0.0
    %247 = vmatpush2.msra.mxu0 0.0
    %248 = vmatprep.subr.mxu0 0.0
    %249 = vmatpush2.msra.mxu0 0.0
    %250 = vmatprep.subr.mxu0 0.0
    %251 = vmatpush2.msra.mxu0 0.0
    %252 = vmatprep.mubr.f32.mxu0 0.0
    %253 = vmatmul.mubr.f32.gmra.mxu0 %v162
    %v254 = vpop.f32.mrf.mxu0
    %v255 = vadd.f32 %v186, %v254
    %v256 = vpop.f32.mrf.mxu0
    %257 = vdwg.mxu0
    %v258 = vmul.f32 %v255, 0.2
    %v259 = vmax.f32 %v255, %v258
    %s260 = scalar_lea.vmem [#allocation5], 256
    %v261 = vld [vmem:[%s260] sm:$0xff]
    %v262 = vld [vmem:[%s260 + $0x8] sm:$0xff]
    %v263 = vld [vmem:[%s260 + $0x10] sm:$0xff]
    %v264 = vld [vmem:[%s260 + $0x18] sm:$0xff]
    %v265 = vld [vmem:[%s260 + $0x20] sm:$0xff]
    %v266 = vld [vmem:[%s260 + $0x28] sm:$0xff]
    %v267 = vld [vmem:[%s260 + $0x30] sm:$0xff]
    %v268 = vld [vmem:[%s260 + $0x38] sm:$0xff]
    %v269 = vld [vmem:[%s260 + $0x40] sm:$0xff]
    %v270 = vld [vmem:[%s260 + $0x48] sm:$0xff]
    %v271 = vld [vmem:[%s260 + $0x50] sm:$0xff]
    %v272 = vld [vmem:[%s260 + $0x58] sm:$0xff]
    %v273 = vld [vmem:[%s260 + $0x60] sm:$0xff]
    %v274 = vld [vmem:[%s260 + $0x68] sm:$0xff]
    %v275 = vld [vmem:[%s260 + $0x70] sm:$0xff]
    %v276 = vld [vmem:[%s260 + $0x78] sm:$0xff]
    %s277 = scalar_lea.vmem [#allocation7], 2
    %v278 = vld [vmem:[%s277] sm:$0x1]
    %v280 = vlaneseq
    %v281 = vshrl.u32 %v280, 7
    %v282 = vsub.s32 0, %v281
    %v283 = vrot.slane %v278, %v282
    %285 = vmatprep.subr.mxu0 0.0
    %286 = vmatpush1.msra.mxu0 %v276
    %287 = vmatprep.subr.mxu0 0.0
    %288 = vmatpush1.msra.mxu0 %v275
    %289 = vmatprep.subr.mxu0 0.0
    %290 = vmatpush1.msra.mxu0 %v274
    %291 = vmatprep.subr.mxu0 0.0
    %292 = vmatpush1.msra.mxu0 %v273
    %293 = vmatprep.subr.mxu0 0.0
    %294 = vmatpush1.msra.mxu0 %v272
    %295 = vmatprep.subr.mxu0 0.0
    %296 = vmatpush1.msra.mxu0 %v271
    %297 = vmatprep.subr.mxu0 0.0
    %298 = vmatpush1.msra.mxu0 %v270
    %299 = vmatprep.subr.mxu0 0.0
    %300 = vmatpush1.msra.mxu0 %v269
    %301 = vmatprep.subr.mxu0 0.0
    %302 = vmatpush1.msra.mxu0 %v268
    %303 = vmatprep.subr.mxu0 0.0
    %304 = vmatpush1.msra.mxu0 %v267
    %305 = vmatprep.subr.mxu0 0.0
    %306 = vmatpush1.msra.mxu0 %v266
    %307 = vmatprep.subr.mxu0 0.0
    %308 = vmatpush1.msra.mxu0 %v265
    %309 = vmatprep.subr.mxu0 0.0
    %310 = vmatpush1.msra.mxu0 %v264
    %311 = vmatprep.subr.mxu0 0.0
    %312 = vmatpush1.msra.mxu0 %v263
    %313 = vmatprep.subr.mxu0 0.0
    %314 = vmatpush1.msra.mxu0 %v262
    %315 = vmatprep.subr.mxu0 0.0
    %316 = vmatpush1.msra.mxu0 %v261
    %317 = vmatprep.subr.mxu0 0.0
    %318 = vmatpush2.msra.mxu0 0.0
    %319 = vmatprep.subr.mxu0 0.0
    %320 = vmatpush2.msra.mxu0 0.0
    %321 = vmatprep.subr.mxu0 0.0
    %322 = vmatpush2.msra.mxu0 0.0
    %323 = vmatprep.subr.mxu0 0.0
    %324 = vmatpush2.msra.mxu0 0.0
    %325 = vmatprep.subr.mxu0 0.0
    %326 = vmatpush2.msra.mxu0 0.0
    %327 = vmatprep.subr.mxu0 0.0
    %328 = vmatpush2.msra.mxu0 0.0
    %329 = vmatprep.subr.mxu0 0.0
    %330 = vmatpush2.msra.mxu0 0.0
    %331 = vmatprep.subr.mxu0 0.0
    %332 = vmatpush2.msra.mxu0 0.0
    %333 = vmatprep.subr.mxu0 0.0
    %334 = vmatpush2.msra.mxu0 0.0
    %335 = vmatprep.subr.mxu0 0.0
    %336 = vmatpush2.msra.mxu0 0.0
    %337 = vmatprep.subr.mxu0 0.0
    %338 = vmatpush2.msra.mxu0 0.0
    %339 = vmatprep.subr.mxu0 0.0
    %340 = vmatpush2.msra.mxu0 0.0
    %341 = vmatprep.subr.mxu0 0.0
    %342 = vmatpush2.msra.mxu0 0.0
    %343 = vmatprep.subr.mxu0 0.0
    %344 = vmatpush2.msra.mxu0 0.0
    %345 = vmatprep.subr.mxu0 0.0
    %346 = vmatpush2.msra.mxu0 0.0
    %347 = vmatprep.subr.mxu0 0.0
    %348 = vmatpush2.msra.mxu0 0.0
    %349 = vmatprep.mubr.f32.mxu0 0.0
    %350 = vmatmul.mubr.f32.gmra.mxu0 %v259
    %v351 = vpop.f32.mrf.mxu0
    %v352 = vadd.f32 %v283, %v351
    %v353 = vpop.f32.mrf.mxu0
    %354 = vdwg.mxu0
    %v355 = vmul.f32 %v352, 0.2
    %v356 = vmax.f32 %v352, %v355
    %s357 = scalar_lea.vmem [#allocation5], 384
    %v358 = vld [vmem:[%s357] sm:$0xff]
    %v359 = vld [vmem:[%s357 + $0x8] sm:$0xff]
    %v360 = vld [vmem:[%s357 + $0x10] sm:$0xff]
    %v361 = vld [vmem:[%s357 + $0x18] sm:$0xff]
    %v362 = vld [vmem:[%s357 + $0x20] sm:$0xff]
    %v363 = vld [vmem:[%s357 + $0x28] sm:$0xff]
    %v364 = vld [vmem:[%s357 + $0x30] sm:$0xff]
    %v365 = vld [vmem:[%s357 + $0x38] sm:$0xff]
    %v366 = vld [vmem:[%s357 + $0x40] sm:$0xff]
    %v367 = vld [vmem:[%s357 + $0x48] sm:$0xff]
    %v368 = vld [vmem:[%s357 + $0x50] sm:$0xff]
    %v369 = vld [vmem:[%s357 + $0x58] sm:$0xff]
    %v370 = vld [vmem:[%s357 + $0x60] sm:$0xff]
    %v371 = vld [vmem:[%s357 + $0x68] sm:$0xff]
    %v372 = vld [vmem:[%s357 + $0x70] sm:$0xff]
    %v373 = vld [vmem:[%s357 + $0x78] sm:$0xff]
    %s374 = scalar_lea.vmem [#allocation7], 3
    %v375 = vld [vmem:[%s374] sm:$0x1]
    %v377 = vlaneseq
    %v378 = vshrl.u32 %v377, 7
    %v379 = vsub.s32 0, %v378
    %v380 = vrot.slane %v375, %v379
    %382 = vmatprep.subr.mxu0 0.0
    %383 = vmatpush1.msra.mxu0 %v373
    %384 = vmatprep.subr.mxu0 0.0
    %385 = vmatpush1.msra.mxu0 %v372
    %386 = vmatprep.subr.mxu0 0.0
    %387 = vmatpush1.msra.mxu0 %v371
    %388 = vmatprep.subr.mxu0 0.0
    %389 = vmatpush1.msra.mxu0 %v370
    %390 = vmatprep.subr.mxu0 0.0
    %391 = vmatpush1.msra.mxu0 %v369
    %392 = vmatprep.subr.mxu0 0.0
    %393 = vmatpush1.msra.mxu0 %v368
    %394 = vmatprep.subr.mxu0 0.0
    %395 = vmatpush1.msra.mxu0 %v367
    %396 = vmatprep.subr.mxu0 0.0
    %397 = vmatpush1.msra.mxu0 %v366
    %398 = vmatprep.subr.mxu0 0.0
    %399 = vmatpush1.msra.mxu0 %v365
    %400 = vmatprep.subr.mxu0 0.0
    %401 = vmatpush1.msra.mxu0 %v364
    %402 = vmatprep.subr.mxu0 0.0
    %403 = vmatpush1.msra.mxu0 %v363
    %404 = vmatprep.subr.mxu0 0.0
    %405 = vmatpush1.msra.mxu0 %v362
    %406 = vmatprep.subr.mxu0 0.0
    %407 = vmatpush1.msra.mxu0 %v361
    %408 = vmatprep.subr.mxu0 0.0
    %409 = vmatpush1.msra.mxu0 %v360
    %410 = vmatprep.subr.mxu0 0.0
    %411 = vmatpush1.msra.mxu0 %v359
    %412 = vmatprep.subr.mxu0 0.0
    %413 = vmatpush1.msra.mxu0 %v358
    %414 = vmatprep.subr.mxu0 0.0
    %415 = vmatpush2.msra.mxu0 0.0
    %416 = vmatprep.subr.mxu0 0.0
    %417 = vmatpush2.msra.mxu0 0.0
    %418 = vmatprep.subr.mxu0 0.0
    %419 = vmatpush2.msra.mxu0 0.0
    %420 = vmatprep.subr.mxu0 0.0
    %421 = vmatpush2.msra.mxu0 0.0
    %422 = vmatprep.subr.mxu0 0.0
    %423 = vmatpush2.msra.mxu0 0.0
    %424 = vmatprep.subr.mxu0 0.0
    %425 = vmatpush2.msra.mxu0 0.0
    %426 = vmatprep.subr.mxu0 0.0
    %427 = vmatpush2.msra.mxu0 0.0
    %428 = vmatprep.subr.mxu0 0.0
    %429 = vmatpush2.msra.mxu0 0.0
    %430 = vmatprep.subr.mxu0 0.0
    %431 = vmatpush2.msra.mxu0 0.0
    %432 = vmatprep.subr.mxu0 0.0
    %433 = vmatpush2.msra.mxu0 0.0
    %434 = vmatprep.subr.mxu0 0.0
    %435 = vmatpush2.msra.mxu0 0.0
    %436 = vmatprep.subr.mxu0 0.0
    %437 = vmatpush2.msra.mxu0 0.0
    %438 = vmatprep.subr.mxu0 0.0
    %439 = vmatpush2.msra.mxu0 0.0
    %440 = vmatprep.subr.mxu0 0.0
    %441 = vmatpush2.msra.mxu0 0.0
    %442 = vmatprep.subr.mxu0 0.0
    %443 = vmatpush2.msra.mxu0 0.0
    %444 = vmatprep.subr.mxu0 0.0
    %445 = vmatpush2.msra.mxu0 0.0
    %446 = vmatprep.mubr.f32.mxu0 0.0
    %447 = vmatmul.mubr.f32.gmra.mxu0 %v356
    %v448 = vpop.f32.mrf.mxu0
    %v449 = vadd.f32 %v380, %v448
    %v450 = vpop.f32.mrf.mxu0
    %451 = vdwg.mxu0
    %v452 = vmul.f32 %v449, 0.2
    %v453 = vmax.f32 %v449, %v452
    %454 = vst [vmem:[#allocation8] sm:$0xff] %v453
    // Predicated region
    $region26: #{tpu_custom_call.1} parent=1 // pred_check
      _
    $region27: #{tpu_custom_call.1} parent=1 // pred_check_branch
      %456 = sbr.rel (0) target = $region29
    $region28: #{tpu_custom_call.1} parent=1 // pred_region
      %s458 = ssub.s32 128, 128
      %459 = vsyncadd [#allocation4], %s458
      %s461 = sshll.u32 [#allocation8], 4
      %s462 = int_to_ptr.vmem [resolvable:$true] %s461
      %464 = dma.vmem_to_hbm [thread:$0]  %s462, 128, %s3, [#allocation4]
    $region29: #{tpu_custom_call.1} parent=1 // pred_fallthru
      _
    // Predicated region
    $region30: #{tpu_custom_call.1} parent=1 // pred_check
      _
    $region31: #{tpu_custom_call.1} parent=1 // pred_check_branch
      %466 = sbr.rel (0) target = $region33
    $region32: #{tpu_custom_call.1} parent=1 // pred_region
      %467 = dma.done [#allocation4], 128
    $region33: #{tpu_custom_call.1} parent=1 // pred_fallthru
      _
    %468 = vsyncpa [#allocation3], 1
    %469 = vsyncpa [#allocation6], 1
    %470 = vsyncpa [#allocation4], 1

</llo_original>
